<compile_context>
chip_gen: v5e
topology: v5e:2x2
jax: 0.10.0
libtpu: 0.0.40
codegen_flags: <defaults>
</compile_context>

<pallas_src>
import math

import jax
import jax.numpy as jnp
from jax.experimental import pallas as pl
from jax.experimental.pallas import tpu as pltpu


def _encoder_kernel(x_ref, w_ref, b_ref, ok_ref, ov_ref):
    # x_ref:  (TM, f*D_in)           row tile of (folded) embeddings
    # w_ref:  (f*D_in, 2*f*H)        fused block-diagonal [Wk | Wv]
    # b_ref:  (1, 2*f*H)             fused bias [bk | bv] (tiled f times)
    # ok/ov:  (TM, f*H)              key / value output tiles
    h = ok_ref.shape[-1]
    r = jnp.dot(x_ref[...], w_ref[...], preferred_element_type=jnp.float32)
    r = r + b_ref[...]
    ok_ref[...] = r[:, :h].astype(ok_ref.dtype)
    ov_ref[...] = r[:, h:].astype(ov_ref.dtype)


def _min_fold(d):
    # smallest f such that f*d is a multiple of 128
    return 128 // math.gcd(128, d)


def _pick_tile(m_rows, target):
    """Largest legal row tile <= target that divides m_rows (8-aligned), else full."""
    if m_rows <= target:
        return m_rows
    t = target - (target % 8)
    while t >= 8:
        if m_rows % t == 0:
            return t
        t -= 8
    return m_rows  # fall back to a single full-extent block


def neuron_encoder_forward(embeddings, wk, bk, wv, bv, *, num_duplicates, out_len,
                           target_rows=8192, out_dtype=None):
    """Pallas implementation of NeuronEncoder.forward.

    embeddings: (B, S, D_in)  with D_in = out_len * num_duplicates
    wk, wv:     (D_in, H)     (transposed w.r.t. PyTorch nn.Linear.weight)
    bk, bv:     (H,)
    Returns (keys, vals), each (B, S * num_duplicates, out_len).
    Requires H == out_len * num_duplicates (implied by the PyTorch .view).
    out_dtype: optional narrower output dtype (e.g. jnp.bfloat16) to cut
    writeback bytes; accumulation stays f32.
    """
    B, S, D_in = embeddings.shape
    H = wk.shape[1]
    assert H == out_len * num_duplicates, "hidden_size must equal out_len * num_duplicates"
    M = B * S
    out_dtype = embeddings.dtype if out_dtype is None else out_dtype

    # ---- lane-folding factor: fold f rows into one so last dims are 128-dense.
    f = 1
    cand = math.lcm(_min_fold(D_in), _min_fold(H))
    if cand > 1 and cand <= 64 and M % cand == 0:
        f = cand

    M_f = M // f
    Din_f = D_in * f
    H_f = H * f

    # Free, contiguous reshape: same memory layout.
    x2d = embeddings.reshape(M_f, Din_f)

    # Block-diagonal fold of the weights + fusion of the two linears.
    if f > 1:
        eye_f = jnp.eye(f, dtype=wk.dtype)
        wk_f = jnp.kron(eye_f, wk)             # (Din_f, H_f)
        wv_f = jnp.kron(eye_f, wv)             # (Din_f, H_f)
    else:
        wk_f, wv_f = wk, wv
    w_cat = jnp.concatenate([wk_f, wv_f], axis=1)                    # (Din_f, 2*H_f)
    b_cat = jnp.concatenate([jnp.tile(bk, f), jnp.tile(bv, f)]).reshape(1, 2 * H_f)

    # ---- row tiling: large tiles to amortize per-step overhead, >=1 grid step.
    target_f = max(1, target_rows // f)
    tile = _pick_tile(M_f, target_f)
    grid = (M_f // tile,)

    out_shape = (
        jax.ShapeDtypeStruct((M_f, H_f), out_dtype),
        jax.ShapeDtypeStruct((M_f, H_f), out_dtype),
    )

    keys2d, vals2d = pl.pallas_call(
        _encoder_kernel,
        out_shape=out_shape,
        grid_spec=pltpu.PrefetchScalarGridSpec(
            num_scalar_prefetch=0,
            grid=grid,
            in_specs=[
                pl.BlockSpec((tile, Din_f), lambda i: (i, 0)),        # x tile
                pl.BlockSpec((Din_f, 2 * H_f), lambda i: (0, 0)),     # fused weights (resident)
                pl.BlockSpec((1, 2 * H_f), lambda i: (0, 0)),         # fused bias   (resident)
            ],
            out_specs=[
                pl.BlockSpec((tile, H_f), lambda i: (i, 0)),          # keys
                pl.BlockSpec((tile, H_f), lambda i: (i, 0)),          # vals
            ],
        ),
        compiler_params=pltpu.CompilerParams(
            dimension_semantics=("parallel",),
        ),
    )(x2d, w_cat, b_cat)

    # (M_f, H_f) has the exact memory layout of (M, H); the .view equivalent
    # to (B, S*num_duplicates, out_len) is therefore a free contiguous reshape.
    keys = keys2d.reshape(B, S * num_duplicates, out_len)
    vals = vals2d.reshape(B, S * num_duplicates, out_len)
    return keys, vals


def _init_linear(key, fan_in, fan_out, dtype=jnp.float32):
    # Deterministic init mimicking nn.Linear's U(-1/sqrt(fan_in), 1/sqrt(fan_in)).
    kw, kb = jax.random.split(key)
    bound = 1.0 / jnp.sqrt(jnp.asarray(fan_in, dtype))
    w = jax.random.uniform(kw, (fan_in, fan_out), dtype, -bound, bound)  # stored (D_in, H)
    b = jax.random.uniform(kb, (fan_out,), dtype, -bound, bound)
    return w, b


if __name__ == "__main__":
    # Small config consistent with the module:
    #   vec_size=8, num_heads=2  -> out_len = 16
    #   num_duplicates=2         -> in_features = out_len*num_duplicates = 32
    #   hidden_size = 32 (must equal out_len*num_duplicates for the .view to work)
    vec_size, num_heads, num_duplicates = 8, 2, 2
    out_len = vec_size * num_heads                # 16
    in_features = out_len * num_duplicates        # 32
    hidden_size = in_features                     # 32
    B, S = 2, 8

    root = jax.random.PRNGKey(0)
    k_emb, k_key, k_val = jax.random.split(root, 3)

    embeddings = jax.random.normal(k_emb, (B, S, in_features), jnp.float32)
    wk, bk = _init_linear(k_key, in_features, hidden_size)
    wv, bv = _init_linear(k_val, in_features, hidden_size)

    keys, vals = neuron_encoder_forward(
        embeddings, wk, bk, wv, bv,
        num_duplicates=num_duplicates, out_len=out_len,
    )
    jax.block_until_ready((keys, vals))

    # Reference check in plain JAX (same math as PyTorch forward).
    ref_k = (embeddings.reshape(B * S, in_features) @ wk + bk).reshape(
        B, S * num_duplicates, out_len)
    ref_v = (embeddings.reshape(B * S, in_features) @ wv + bv).reshape(
        B, S * num_duplicates, out_len)
    assert keys.shape == (B, S * num_duplicates, out_len)
    assert vals.shape == (B, S * num_duplicates, out_len)
    assert jnp.allclose(keys, ref_k, atol=1e-5, rtol=1e-5)
    assert jnp.allclose(vals, ref_v, atol=1e-5, rtol=1e-5)

    print("KERNEL_OK")
</pallas_src>

<mosaic_0001>
module attributes {stable_mosaic.version = 11 : i64} {
  func.func @_encoder_kernel(%arg0: i32, %arg1: memref<4x128xf32, #tpu.memory_space<vmem>>, %arg2: memref<128x256xf32, #tpu.memory_space<vmem>>, %arg3: memref<1x256xf32, #tpu.memory_space<vmem>>, %arg4: memref<4x128xf32, #tpu.memory_space<vmem>>, %arg5: memref<4x128xf32, #tpu.memory_space<vmem>>) attributes {dimension_semantics = [#tpu.dimension_semantics<parallel>], iteration_bounds = array<i64: 1>, scalar_prefetch = 0 : i64, scratch_operands = 0 : i64, tpu.core_type = #tpu.core_type<tc>, window_params = [{transform_indices = @transform_0, window_bounds = array<i64: 4, 128>}, {pipeline_mode = #tpu.pipeline_mode<synchronous>, transform_indices = @transform_1, window_bounds = array<i64: 128, 256>}, {pipeline_mode = #tpu.pipeline_mode<synchronous>, transform_indices = @transform_2, window_bounds = array<i64: 1, 256>}, {transform_indices = @transform_3, window_bounds = array<i64: 4, 128>}, {transform_indices = @transform_4, window_bounds = array<i64: 4, 128>}]} {
    %c0 = arith.constant 0 : index
    %c0_0 = arith.constant 0 : index
    %0 = vector.load %arg1[%c0, %c0_0] : memref<4x128xf32, #tpu.memory_space<vmem>>, vector<4x128xf32>
    %c0_1 = arith.constant 0 : index
    %c0_2 = arith.constant 0 : index
    %1 = vector.load %arg2[%c0_1, %c0_2] : memref<128x256xf32, #tpu.memory_space<vmem>>, vector<128x256xf32>
    %cst = arith.constant dense<0.000000e+00> : vector<4x256xf32>
    %2 = tpu.matmul %0, %1, %cst {dimension_numbers = #tpu.dot_dimension_numbers<[1], [0], [0], [1], [0, 0, 1, 1], [], []>} : vector<4x128xf32>, vector<128x256xf32>, vector<4x256xf32> -> vector<4x256xf32>
    %c0_3 = arith.constant 0 : index
    %c0_4 = arith.constant 0 : index
    %3 = vector.load %arg3[%c0_3, %c0_4] : memref<1x256xf32, #tpu.memory_space<vmem>>, vector<1x256xf32>
    %4 = vector.broadcast %3 : vector<1x256xf32> to vector<4x256xf32>
    %5 = arith.addf %2, %4 : vector<4x256xf32>
    %6 = vector.extract_strided_slice %5 {offsets = [0, 0], sizes = [4, 128], strides = [1, 1]} : vector<4x256xf32> to vector<4x128xf32>
    %c0_5 = arith.constant 0 : index
    %c0_6 = arith.constant 0 : index
    %7 = vector.load %arg4[%c0_5, %c0_6] : memref<4x128xf32, #tpu.memory_space<vmem>>, vector<4x128xf32>
    tpu.vector_store %arg4[%c0_5, %c0_6], %6 {strides = array<i32>} : memref<4x128xf32, #tpu.memory_space<vmem>>, vector<4x128xf32>,
    %8 = vector.extract_strided_slice %5 {offsets = [0, 128], sizes = [4, 128], strides = [1, 1]} : vector<4x256xf32> to vector<4x128xf32>
    %c0_7 = arith.constant 0 : index
    %c0_8 = arith.constant 0 : index
    %9 = vector.load %arg5[%c0_7, %c0_8] : memref<4x128xf32, #tpu.memory_space<vmem>>, vector<4x128xf32>
    tpu.vector_store %arg5[%c0_7, %c0_8], %8 {strides = array<i32>} : memref<4x128xf32, #tpu.memory_space<vmem>>, vector<4x128xf32>,
    return
  }
  func.func @transform_0(%arg0: i32) -> (i32, i32) {
    %c0_i32 = arith.constant 0 : i32
    %c0_i32_0 = arith.constant 0 : i32
    return %arg0, %c0_i32 : i32, i32
  }
  func.func @transform_1(%arg0: i32) -> (i32, i32) {
    %c0_i32 = arith.constant 0 : i32
    %c0_i32_0 = arith.constant 0 : i32
    %c0_i32_1 = arith.constant 0 : i32
    return %c0_i32, %c0_i32_0 : i32, i32
  }
  func.func @transform_2(%arg0: i32) -> (i32, i32) {
    %c0_i32 = arith.constant 0 : i32
    %c0_i32_0 = arith.constant 0 : i32
    %c0_i32_1 = arith.constant 0 : i32
    return %c0_i32, %c0_i32_0 : i32, i32
  }
  func.func @transform_3(%arg0: i32) -> (i32, i32) {
    %c0_i32 = arith.constant 0 : i32
    %c0_i32_0 = arith.constant 0 : i32
    return %arg0, %c0_i32 : i32, i32
  }
  func.func @transform_4(%arg0: i32) -> (i32, i32) {
    %c0_i32 = arith.constant 0 : i32
    %c0_i32_0 = arith.constant 0 : i32
    return %arg0, %c0_i32 : i32, i32
  }
}

</mosaic_0001>

<llo_original>
// kernel: tpu_custom_call.1
$region0: #{tpu_custom_call.1}
  #allocation0 [shape = 'u32[]', space=smem, size = 0x4, offset = 0x4, fixed_abs, tag = 'smem constant byte address 0x4 - core index']
  #allocation1 [shape = 'u32[72,128]{1,0:T(1,128)}', space=vmem, size = 0x9000, scoped, tag = 'internal scratch']
  %s0 = inlined_call_operand.hbm [shape: f32[4,128], index: 0, kind: input, shape index: {}]
  %s1 = inlined_call_operand.hbm [shape: f32[128,256], index: 1, kind: input, shape index: {}]
  %s2 = inlined_call_operand.hbm [shape: f32[1,256], index: 2, kind: input, shape index: {}]
  %s3 = inlined_call_operand.hbm [shape: f32[4,128], index: 3, kind: output, shape index: {0}]
  %s4 = inlined_call_operand.hbm [shape: f32[4,128], index: 4, kind: output, shape index: {1}]
  %5 = xla_tuple %s3, %s4
  %s6 = sld [smem:[#allocation0]]
  $region42: #{tpu_custom_call.1} parent=0
    _
  %s8 = ssub.s32 1, %s6
  %s9 = scalar_select 0, %s8, %s6
  $region1: #{tpu_custom_call.1} parent=0
    #allocation2 [shape = 'u8[2048]{0}', space=vmem, size = 0x800, scoped, tag = 'input window, operand 0, single buffered']
    #allocation3 [shape = 's32[1]{0}', space=sflag, size = 0x4, scoped, tag = 'scoped memory for tpu_custom_call.1']
    #allocation4 [shape = 's32[1]{0}', space=sflag, size = 0x4, scoped, tag = 'scoped memory for tpu_custom_call.1']
    #allocation5 [shape = 'u8[131072]{0}', space=vmem, size = 0x20000, scoped, tag = 'input window, operand 1, single buffered']
    #allocation6 [shape = 's32[1]{0}', space=sflag, size = 0x4, scoped, tag = 'scoped memory for tpu_custom_call.1']
    #allocation7 [shape = 'u8[1024]{0}', space=vmem, size = 0x400, scoped, tag = 'input window, operand 2, single buffered']
    #allocation8 [shape = 'u8[2048]{0}', space=vmem, size = 0x800, scoped, tag = 'output window, operand 0, single buffered']
    #allocation9 [shape = 'u8[2048]{0}', space=vmem, size = 0x800, scoped, tag = 'output window, operand 1, single buffered']
    #allocation10 [shape = 's32[1]{0}', space=sflag, size = 0x4, scoped, tag = 'scoped memory for tpu_custom_call.1']
    %10 = vsyncpa [#allocation3], 0
    %11 = vsyncpa [#allocation6], 0
    %12 = vsyncpa [#allocation4], 0
    %13 = vsyncpa [#allocation10], 0
    // Predicated region
    $region2: #{tpu_custom_call.1} parent=1 // pred_check
      _
    $region3: #{tpu_custom_call.1} parent=1 // pred_check_branch
      %15 = sbr.rel (0) target = $region5
    $region4: #{tpu_custom_call.1} parent=1 // pred_region
      %17 = vsyncadd [#allocation3], 0
      %s19 = sshll.u32 %s0, 4
      %s20 = int_to_ptr.hbm [resolvable:$true] %s19
      %s21 = sshll.u32 [#allocation2], 4
      %s22 = int_to_ptr.vmem [resolvable:$true] %s21
      %24 = dma.hbm_to_vmem [thread:$0]  %s20, 64, %s22, [#allocation3]
    $region5: #{tpu_custom_call.1} parent=1 // pred_fallthru
      _
    // Predicated region
    $region6: #{tpu_custom_call.1} parent=1 // pred_check
      _
    $region7: #{tpu_custom_call.1} parent=1 // pred_check_branch
      %26 = sbr.rel (0) target = $region9
    $region8: #{tpu_custom_call.1} parent=1 // pred_region
      %28 = vsyncadd [#allocation6], 0
      %s29 = sshll.u32 %s1, 4
      %s30 = int_to_ptr.hbm [resolvable:$true] %s29
      %s31 = sshll.u32 [#allocation5], 4
      %s32 = int_to_ptr.vmem [resolvable:$true] %s31
      %37 = dma.hbm_to_vmem [thread:$0]  %s30, 4096, %s32, [#allocation6], 256, 256, 16
    $region9: #{tpu_custom_call.1} parent=1 // pred_fallthru
      _
    // Predicated region
    $region10: #{tpu_custom_call.1} parent=1 // pred_check
      _
    $region11: #{tpu_custom_call.1} parent=1 // pred_check_branch
      %39 = sbr.rel (0) target = $region13
    $region12: #{tpu_custom_call.1} parent=1 // pred_region
      %41 = vsyncadd [#allocation6], 0
      %s43 = sshll.u32 %s2, 4
      %s44 = int_to_ptr.hbm [resolvable:$true] %s43
      %s45 = sshll.u32 [#allocation7], 4
      %s46 = int_to_ptr.vmem [resolvable:$true] %s45
      %48 = dma.hbm_to_vmem [thread:$0]  %s44, 32, %s46, [#allocation6]
    $region13: #{tpu_custom_call.1} parent=1 // pred_fallthru
      _
    // Predicated region
    $region14: #{tpu_custom_call.1} parent=1 // pred_check
      _
    $region15: #{tpu_custom_call.1} parent=1 // pred_check_branch
      %50 = sbr.rel (0) target = $region17
    $region16: #{tpu_custom_call.1} parent=1 // pred_region
      %52 = dma.done [#allocation3], 64
    $region17: #{tpu_custom_call.1} parent=1 // pred_fallthru
      _
    // Predicated region
    $region18: #{tpu_custom_call.1} parent=1 // pred_check
      _
    $region19: #{tpu_custom_call.1} parent=1 // pred_check_branch
      %54 = sbr.rel (0) target = $region21
    $region20: #{tpu_custom_call.1} parent=1 // pred_region
      %56 = dma.done [#allocation6], 4096
    $region21: #{tpu_custom_call.1} parent=1 // pred_fallthru
      _
    // Predicated region
    $region22: #{tpu_custom_call.1} parent=1 // pred_check
      _
    $region23: #{tpu_custom_call.1} parent=1 // pred_check_branch
      %58 = sbr.rel (0) target = $region25
    $region24: #{tpu_custom_call.1} parent=1 // pred_region
      %60 = dma.done [#allocation6], 32
    $region25: #{tpu_custom_call.1} parent=1 // pred_fallthru
      _
    %v61 = vld [vmem:[#allocation2] sm:$0xf]
    %v62 = vld [vmem:[#allocation5] sm:$0xff]
    %v63 = vld [vmem:[#allocation5 + $0x8] sm:$0xff]
    %v64 = vld [vmem:[#allocation5 + $0x10] sm:$0xff]
    %v65 = vld [vmem:[#allocation5 + $0x18] sm:$0xff]
    %v66 = vld [vmem:[#allocation5 + $0x20] sm:$0xff]
    %v67 = vld [vmem:[#allocation5 + $0x28] sm:$0xff]
    %v68 = vld [vmem:[#allocation5 + $0x30] sm:$0xff]
    %v69 = vld [vmem:[#allocation5 + $0x38] sm:$0xff]
    %v70 = vld [vmem:[#allocation5 + $0x40] sm:$0xff]
    %v71 = vld [vmem:[#allocation5 + $0x48] sm:$0xff]
    %v72 = vld [vmem:[#allocation5 + $0x50] sm:$0xff]
    %v73 = vld [vmem:[#allocation5 + $0x58] sm:$0xff]
    %v74 = vld [vmem:[#allocation5 + $0x60] sm:$0xff]
    %v75 = vld [vmem:[#allocation5 + $0x68] sm:$0xff]
    %v76 = vld [vmem:[#allocation5 + $0x70] sm:$0xff]
    %v77 = vld [vmem:[#allocation5 + $0x78] sm:$0xff]
    %v78 = vld [vmem:[#allocation5 + $0x80] sm:$0xff]
    %v79 = vld [vmem:[#allocation5 + $0x88] sm:$0xff]
    %v80 = vld [vmem:[#allocation5 + $0x90] sm:$0xff]
    %v81 = vld [vmem:[#allocation5 + $0x98] sm:$0xff]
    %v82 = vld [vmem:[#allocation5 + $0xa0] sm:$0xff]
    %v83 = vld [vmem:[#allocation5 + $0xa8] sm:$0xff]
    %v84 = vld [vmem:[#allocation5 + $0xb0] sm:$0xff]
    %v85 = vld [vmem:[#allocation5 + $0xb8] sm:$0xff]
    %v86 = vld [vmem:[#allocation5 + $0xc0] sm:$0xff]
    %v87 = vld [vmem:[#allocation5 + $0xc8] sm:$0xff]
    %v88 = vld [vmem:[#allocation5 + $0xd0] sm:$0xff]
    %v89 = vld [vmem:[#allocation5 + $0xd8] sm:$0xff]
    %v90 = vld [vmem:[#allocation5 + $0xe0] sm:$0xff]
    %v91 = vld [vmem:[#allocation5 + $0xe8] sm:$0xff]
    %v92 = vld [vmem:[#allocation5 + $0xf0] sm:$0xff]
    %v93 = vld [vmem:[#allocation5 + $0xf8] sm:$0xff]
    %v94 = vld [vmem:[#allocation7] sm:$0x3]
    %v96 = vperm.slane %v94, 0
    %v97 = vperm.slane %v94, 1
    %100 = vmatpush.msra.mxu0 %v92
    %101 = vmatpush.msra.mxu0 %v90
    %102 = vmatpush.msra.mxu0 %v88
    %103 = vmatpush.msra.mxu0 %v86
    %104 = vmatpush.msra.mxu0 %v84
    %105 = vmatpush.msra.mxu0 %v82
    %106 = vmatpush.msra.mxu0 %v80
    %107 = vmatpush.msra.mxu0 %v78
    %108 = vmatpush.msra.mxu0 %v76
    %109 = vmatpush.msra.mxu0 %v74
    %110 = vmatpush.msra.mxu0 %v72
    %111 = vmatpush.msra.mxu0 %v70
    %112 = vmatpush.msra.mxu0 %v68
    %113 = vmatpush.msra.mxu0 %v66
    %114 = vmatpush.msra.mxu0 %v64
    %115 = vmatpush.msra.mxu0 %v62
    %116 = vmatmul.f32.gmra.mxu0 %v61
    %v117 = vpop.f32.mrf.mxu0
    %v118 = vadd.f32 %v96, %v117
    %119 = vdwg.mxu0
    %120 = vmatpush.msra.mxu0 %v93
    %121 = vmatpush.msra.mxu0 %v91
    %122 = vmatpush.msra.mxu0 %v89
    %123 = vmatpush.msra.mxu0 %v87
    %124 = vmatpush.msra.mxu0 %v85
    %125 = vmatpush.msra.mxu0 %v83
    %126 = vmatpush.msra.mxu0 %v81
    %127 = vmatpush.msra.mxu0 %v79
    %128 = vmatpush.msra.mxu0 %v77
    %129 = vmatpush.msra.mxu0 %v75
    %130 = vmatpush.msra.mxu0 %v73
    %131 = vmatpush.msra.mxu0 %v71
    %132 = vmatpush.msra.mxu0 %v69
    %133 = vmatpush.msra.mxu0 %v67
    %134 = vmatpush.msra.mxu0 %v65
    %135 = vmatpush.msra.mxu0 %v63
    %136 = vmatmul.f32.gmra.mxu0 %v61
    %v137 = vpop.f32.mrf.mxu0
    %v138 = vadd.f32 %v97, %v137
    %139 = vdwg.mxu0
    %140 = vst [vmem:[#allocation8] sm:$0xf] %v118
    %141 = vst [vmem:[#allocation9] sm:$0xf] %v138
    // Predicated region
    $region26: #{tpu_custom_call.1} parent=1 // pred_check
      _
    $region27: #{tpu_custom_call.1} parent=1 // pred_check_branch
      %143 = sbr.rel (0) target = $region29
    $region28: #{tpu_custom_call.1} parent=1 // pred_region
      %145 = vsyncadd [#allocation4], 0
      %s147 = sshll.u32 [#allocation8], 4
      %s148 = int_to_ptr.vmem [resolvable:$true] %s147
      %s149 = sshll.u32 %s3, 4
      %s150 = int_to_ptr.hbm [resolvable:$true] %s149
      %152 = dma.vmem_to_hbm [thread:$0]  %s148, 64, %s150, [#allocation4]
    $region29: #{tpu_custom_call.1} parent=1 // pred_fallthru
      _
    // Predicated region
    $region30: #{tpu_custom_call.1} parent=1 // pred_check
      _
    $region31: #{tpu_custom_call.1} parent=1 // pred_check_branch
      %154 = sbr.rel (0) target = $region33
    $region32: #{tpu_custom_call.1} parent=1 // pred_region
      %156 = vsyncadd [#allocation10], 0
      %s158 = sshll.u32 [#allocation9], 4
      %s159 = int_to_ptr.vmem [resolvable:$true] %s158
      %s160 = sshll.u32 %s4, 4
      %s161 = int_to_ptr.hbm [resolvable:$true] %s160
      %163 = dma.vmem_to_hbm [thread:$0]  %s159, 64, %s161, [#allocation10]
    $region33: #{tpu_custom_call.1} parent=1 // pred_fallthru
      _
    // Predicated region
    $region34: #{tpu_custom_call.1} parent=1 // pred_check
      _
    $region35: #{tpu_custom_call.1} parent=1 // pred_check_branch
      %165 = sbr.rel (0) target = $region37
    $region36: #{tpu_custom_call.1} parent=1 // pred_region
      %167 = dma.done [#allocation4], 64
    $region37: #{tpu_custom_call.1} parent=1 // pred_fallthru
      _
    // Predicated region
    $region38: #{tpu_custom_call.1} parent=1 // pred_check
      _
    $region39: #{tpu_custom_call.1} parent=1 // pred_check_branch
      %169 = sbr.rel (0) target = $region41
    $region40: #{tpu_custom_call.1} parent=1 // pred_region
      %171 = dma.done [#allocation10], 64
    $region41: #{tpu_custom_call.1} parent=1 // pred_fallthru
      _
    %172 = vsyncpa [#allocation3], 1
    %173 = vsyncpa [#allocation6], 1
    %174 = vsyncpa [#allocation4], 1
    %175 = vsyncpa [#allocation10], 1

</llo_original>
